<compile_context>
chip_gen: v7x
topology: tpu7x:2x2x1
jax: 0.10.0
libtpu: 0.0.40
codegen_flags: <defaults>
</compile_context>

<pallas_src>
import jax
import jax.numpy as jnp
from jax.experimental import pallas as pl
from jax.experimental.pallas import tpu as pltpu

LN_EPS = 1e-5      # nn.LayerNorm default
MAX_TILE_B = 512   # ~2-3 MiB peak VMEM/step -> safe on v5e/v6e/v7x defaults


def _round_up(x, m):
    return (x + m - 1) // m * m


def _layernorm_relu(h, gamma, beta):
    """One-pass LayerNorm (var = E[x^2] - E[x]^2) fused with ReLU, all f32."""
    n = h.shape[-1]
    s1 = jnp.sum(h, axis=-1, keepdims=True)          # XLU lane reduce
    s2 = jnp.sum(h * h, axis=-1, keepdims=True)      # XLU lane reduce (independent)
    mean = s1 * (1.0 / n)
    var = s2 * (1.0 / n) - mean * mean
    inv = jax.lax.rsqrt(var + LN_EPS)                 # EUP
    scale = inv * gamma                               # fold gamma into the scale
    shift = beta - mean * scale
    return jnp.maximum(h * scale + shift, 0.0)


def critic_kernel(s_ref, a_ref,
                  w1s_ref, w1a_ref, b1_ref, g1_ref, bt1_ref,
                  w2_ref, b2_ref, g2_ref, bt2_ref,
                  w3_ref, b3_ref,
                  out_ref):
    # ---- Layer 1: Linear(state_dim + action_dim -> 256), cat folded into a
    # split matmul (bf16 operands, f32 MXU accumulation). ----
    h = (jnp.dot(s_ref[...], w1s_ref[...], preferred_element_type=jnp.float32)
         + jnp.dot(a_ref[...], w1a_ref[...], preferred_element_type=jnp.float32)
         + b1_ref[...])
    h = _layernorm_relu(h, g1_ref[...], bt1_ref[...])

    # ---- Layer 2: Linear(256 -> 128) + LayerNorm + ReLU ----
    h = (jnp.dot(h.astype(jnp.bfloat16), w2_ref[...],
                 preferred_element_type=jnp.float32)
         + b2_ref[...])
    h = _layernorm_relu(h, g2_ref[...], bt2_ref[...])

    # ---- Layer 3: Linear(128 -> 1) as VPU multiply + lane reduce (an MXU
    # matmul here would use 1 of 256 output columns -> wasted push/pop). ----
    out_ref[...] = (jnp.sum(h * w3_ref[...], axis=-1, keepdims=True)
                    + b3_ref[...])


def critic_forward(state, action, params, steps=None):
    """state: [B, state_dim] f32, action: [B, action_dim] f32 -> [B, 1] f32.

    `steps` is accepted for parity with Critic.forward but unused (it is
    unused in the PyTorch module as well).
    """
    del steps
    B, state_dim = state.shape
    action_dim = action.shape[1]
    n_in = state_dim + action_dim

    tile_b = min(MAX_TILE_B, _round_up(B, 8))
    b_pad = _round_up(B, tile_b)
    grid = (b_pad // tile_b,)

    # bf16 matmul operands; f32 accumulation + f32 epilogue in the kernel.
    s_bf = state.astype(jnp.bfloat16)
    a_bf = action.astype(jnp.bfloat16)
    if b_pad != B:
        pad = b_pad - B
        s_bf = jnp.pad(s_bf, ((0, pad), (0, 0)))
        a_bf = jnp.pad(a_bf, ((0, pad), (0, 0)))

    w1s = params["w1s"].astype(jnp.bfloat16)
    w1a = params["w1a"].astype(jnp.bfloat16)
    w2 = params["w2"].astype(jnp.bfloat16)

    args = (s_bf, a_bf,
            w1s, w1a, params["b1"], params["g1"], params["bt1"],
            w2, params["b2"], params["g2"], params["bt2"],
            params["w3"], params["b3"])

    batch_map = lambda i: (i, 0)   # tiled over batch
    const_map = lambda i: (0, 0)   # weights stay resident across grid steps

    in_specs = [
        pl.BlockSpec((tile_b, state_dim), batch_map),
        pl.BlockSpec((tile_b, action_dim), batch_map),
        pl.BlockSpec((state_dim, 256), const_map),
        pl.BlockSpec((action_dim, 256), const_map),
        pl.BlockSpec((1, 256), const_map),
        pl.BlockSpec((1, 256), const_map),
        pl.BlockSpec((1, 256), const_map),
        pl.BlockSpec((256, 128), const_map),
        pl.BlockSpec((1, 128), const_map),
        pl.BlockSpec((1, 128), const_map),
        pl.BlockSpec((1, 128), const_map),
        pl.BlockSpec((1, 128), const_map),
        pl.BlockSpec((1, 1), const_map),
    ]
    out_spec = pl.BlockSpec((tile_b, 1), batch_map)

    flops = 2 * b_pad * (n_in * 256 + 256 * 128 + 128)
    bytes_accessed = (b_pad * n_in * 2                 # bf16 inputs
                      + b_pad * 4                      # f32 output
                      + (n_in * 256 + 256 * 128) * 2   # bf16 weights
                      + (3 * 256 + 4 * 128 + 2) * 4)   # f32 biases/gamma/beta/w3/b3
    cost = pl.CostEstimate(flops=flops,
                           transcendentals=2 * b_pad,
                           bytes_accessed=bytes_accessed)

    out = pl.pallas_call(
        critic_kernel,
        out_shape=jax.ShapeDtypeStruct((b_pad, 1), jnp.float32),
        grid=grid,
        in_specs=in_specs,
        out_specs=out_spec,
        compiler_params=pltpu.CompilerParams(
            dimension_semantics=("parallel",)),
        cost_estimate=cost,
    )(*args)
    return out[:B]


def init_params(key, state_dim, action_dim):
    """Deterministic synthetic init matching the nn.Module parameter shapes."""
    in_dim = state_dim + action_dim
    ks = jax.random.split(key, 6)
    scale1 = 1.0 / jnp.sqrt(in_dim)
    scale2 = 1.0 / jnp.sqrt(256.0)
    scale3 = 1.0 / jnp.sqrt(128.0)
    # W stored as [in, out] (transposed relative to PyTorch's [out, in]).
    w1 = jax.random.uniform(ks[0], (in_dim, 256), jnp.float32, -scale1, scale1)
    b1 = jax.random.uniform(ks[1], (1, 256), jnp.float32, -scale1, scale1)
    w2 = jax.random.uniform(ks[2], (256, 128), jnp.float32, -scale2, scale2)
    b2 = jax.random.uniform(ks[3], (1, 128), jnp.float32, -scale2, scale2)
    w3 = jax.random.uniform(ks[4], (1, 128), jnp.float32, -scale3, scale3)  # row form
    b3 = jax.random.uniform(ks[5], (1, 1), jnp.float32, -scale3, scale3)
    return {
        "w1s": w1[:state_dim], "w1a": w1[state_dim:], "b1": b1,
        "g1": jnp.ones((1, 256), jnp.float32), "bt1": jnp.zeros((1, 256), jnp.float32),
        "w2": w2, "b2": b2,
        "g2": jnp.ones((1, 128), jnp.float32), "bt2": jnp.zeros((1, 128), jnp.float32),
        "w3": w3, "b3": b3,
    }


def _layernorm_ref(h, gamma, beta):
    mean = jnp.mean(h, axis=-1, keepdims=True)
    centered = h - mean
    var = jnp.mean(centered * centered, axis=-1, keepdims=True)
    return centered * jax.lax.rsqrt(var + LN_EPS) * gamma + beta


def critic_ref(state, action, params):
    """Pure-JAX f32 reference matching the PyTorch module semantics."""
    x = jnp.concatenate([state, action], axis=1)
    w1 = jnp.concatenate([params["w1s"], params["w1a"]], axis=0)
    h = x @ w1 + params["b1"]
    h = jnp.maximum(_layernorm_ref(h, params["g1"], params["bt1"]), 0.0)
    h = h @ params["w2"] + params["b2"]
    h = jnp.maximum(_layernorm_ref(h, params["g2"], params["bt2"]), 0.0)
    return h @ params["w3"].T + params["b3"]


if __name__ == "__main__":
    B, STATE_DIM, ACTION_DIM = 8, 16, 8
    key = jax.random.PRNGKey(0)
    k_s, k_a, k_p = jax.random.split(key, 3)

    state = jax.random.normal(k_s, (B, STATE_DIM), jnp.float32)
    action = jax.random.normal(k_a, (B, ACTION_DIM), jnp.float32)
    params = init_params(k_p, STATE_DIM, ACTION_DIM)

    # `steps` argument of Critic.forward is unused in the PyTorch module.
    out = critic_forward(state, action, params, steps=0)
    out = jax.block_until_ready(out)

    ref = critic_ref(state, action, params)
    assert out.shape == (B, 1)
    # Tolerance accommodates bf16 matmul operands (f32 accumulation).
    assert jnp.allclose(out, ref, atol=3e-2, rtol=3e-2), (
        f"max abs diff = {float(jnp.max(jnp.abs(out - ref)))}")
    print("KERNEL_OK")
</pallas_src>

<mosaic_0001>
module attributes {stable_mosaic.version = 11 : i64} {
  func.func @critic_kernel(%arg0: i32, %arg1: memref<8x16xbf16, #tpu.memory_space<vmem>>, %arg2: memref<8x8xbf16, #tpu.memory_space<vmem>>, %arg3: memref<16x256xbf16, #tpu.memory_space<vmem>>, %arg4: memref<8x256xbf16, #tpu.memory_space<vmem>>, %arg5: memref<1x256xf32, #tpu.memory_space<vmem>>, %arg6: memref<1x256xf32, #tpu.memory_space<vmem>>, %arg7: memref<1x256xf32, #tpu.memory_space<vmem>>, %arg8: memref<256x128xbf16, #tpu.memory_space<vmem>>, %arg9: memref<1x128xf32, #tpu.memory_space<vmem>>, %arg10: memref<1x128xf32, #tpu.memory_space<vmem>>, %arg11: memref<1x128xf32, #tpu.memory_space<vmem>>, %arg12: memref<1x128xf32, #tpu.memory_space<vmem>>, %arg13: memref<1x1xf32, #tpu.memory_space<vmem>>, %arg14: memref<8x1xf32, #tpu.memory_space<vmem>>) attributes {dimension_semantics = [#tpu.dimension_semantics<parallel>], iteration_bounds = array<i64: 1>, scalar_prefetch = 0 : i64, scratch_operands = 0 : i64, tpu.core_type = #tpu.core_type<tc>, window_params = [{transform_indices = @transform_0, window_bounds = array<i64: 8, 16>}, {transform_indices = @transform_1, window_bounds = array<i64: 8, 8>}, {pipeline_mode = #tpu.pipeline_mode<synchronous>, transform_indices = @transform_2, window_bounds = array<i64: 16, 256>}, {pipeline_mode = #tpu.pipeline_mode<synchronous>, transform_indices = @transform_3, window_bounds = array<i64: 8, 256>}, {pipeline_mode = #tpu.pipeline_mode<synchronous>, transform_indices = @transform_4, window_bounds = array<i64: 1, 256>}, {pipeline_mode = #tpu.pipeline_mode<synchronous>, transform_indices = @transform_5, window_bounds = array<i64: 1, 256>}, {pipeline_mode = #tpu.pipeline_mode<synchronous>, transform_indices = @transform_6, window_bounds = array<i64: 1, 256>}, {pipeline_mode = #tpu.pipeline_mode<synchronous>, transform_indices = @transform_7, window_bounds = array<i64: 256, 128>}, {pipeline_mode = #tpu.pipeline_mode<synchronous>, transform_indices = @transform_8, window_bounds = array<i64: 1, 128>}, {pipeline_mode = #tpu.pipeline_mode<synchronous>, transform_indices = @transform_9, window_bounds = array<i64: 1, 128>}, {pipeline_mode = #tpu.pipeline_mode<synchronous>, transform_indices = @transform_10, window_bounds = array<i64: 1, 128>}, {pipeline_mode = #tpu.pipeline_mode<synchronous>, transform_indices = @transform_11, window_bounds = array<i64: 1, 128>}, {pipeline_mode = #tpu.pipeline_mode<synchronous>, transform_indices = @transform_12, window_bounds = array<i64: 1, 1>}, {transform_indices = @transform_13, window_bounds = array<i64: 8, 1>}]} {
    %c0 = arith.constant 0 : index
    %c0_0 = arith.constant 0 : index
    %0 = vector.load %arg1[%c0, %c0_0] : memref<8x16xbf16, #tpu.memory_space<vmem>>, vector<8x16xbf16>
    %c0_1 = arith.constant 0 : index
    %c0_2 = arith.constant 0 : index
    %1 = vector.load %arg3[%c0_1, %c0_2] : memref<16x256xbf16, #tpu.memory_space<vmem>>, vector<16x256xbf16>
    %cst = arith.constant dense<0.000000e+00> : vector<8x256xf32>
    %2 = tpu.matmul %0, %1, %cst {dimension_numbers = #tpu.dot_dimension_numbers<[1], [0], [0], [1], [0, 0, 1, 1], [], []>} : vector<8x16xbf16>, vector<16x256xbf16>, vector<8x256xf32> -> vector<8x256xf32>
    %c0_3 = arith.constant 0 : index
    %c0_4 = arith.constant 0 : index
    %3 = vector.load %arg2[%c0_3, %c0_4] : memref<8x8xbf16, #tpu.memory_space<vmem>>, vector<8x8xbf16>
    %c0_5 = arith.constant 0 : index
    %c0_6 = arith.constant 0 : index
    %4 = vector.load %arg4[%c0_5, %c0_6] : memref<8x256xbf16, #tpu.memory_space<vmem>>, vector<8x256xbf16>
    %cst_7 = arith.constant dense<0.000000e+00> : vector<8x256xf32>
    %5 = tpu.matmul %3, %4, %cst_7 {dimension_numbers = #tpu.dot_dimension_numbers<[1], [0], [0], [1], [0, 0, 1, 1], [], []>} : vector<8x8xbf16>, vector<8x256xbf16>, vector<8x256xf32> -> vector<8x256xf32>
    %6 = arith.addf %2, %5 : vector<8x256xf32>
    %c0_8 = arith.constant 0 : index
    %c0_9 = arith.constant 0 : index
    %7 = vector.load %arg5[%c0_8, %c0_9] : memref<1x256xf32, #tpu.memory_space<vmem>>, vector<1x256xf32>
    %8 = vector.broadcast %7 : vector<1x256xf32> to vector<8x256xf32>
    %9 = arith.addf %6, %8 : vector<8x256xf32>
    %c0_10 = arith.constant 0 : index
    %c0_11 = arith.constant 0 : index
    %10 = vector.load %arg6[%c0_10, %c0_11] : memref<1x256xf32, #tpu.memory_space<vmem>>, vector<1x256xf32>
    %c0_12 = arith.constant 0 : index
    %c0_13 = arith.constant 0 : index
    %11 = vector.load %arg7[%c0_12, %c0_13] : memref<1x256xf32, #tpu.memory_space<vmem>>, vector<1x256xf32>
    %cst_14 = arith.constant dense<0.000000e+00> : vector<8xf32>
    %12 = vector.multi_reduction <add>, %9, %cst_14 [1] : vector<8x256xf32> to vector<8xf32>
    %13 = vector.shape_cast %12 : vector<8xf32> to vector<8x1xf32>
    %14 = arith.mulf %9, %9 : vector<8x256xf32>
    %cst_15 = arith.constant dense<0.000000e+00> : vector<8xf32>
    %15 = vector.multi_reduction <add>, %14, %cst_15 [1] : vector<8x256xf32> to vector<8xf32>
    %16 = vector.shape_cast %15 : vector<8xf32> to vector<8x1xf32>
    %cst_16 = arith.constant 3.906250e-03 : f32
    %17 = vector.broadcast %cst_16 : f32 to vector<8x1xf32>
    %18 = arith.mulf %13, %17 : vector<8x1xf32>
    %cst_17 = arith.constant 3.906250e-03 : f32
    %19 = vector.broadcast %cst_17 : f32 to vector<8x1xf32>
    %20 = arith.mulf %16, %19 : vector<8x1xf32>
    %21 = arith.mulf %18, %18 : vector<8x1xf32>
    %22 = arith.subf %20, %21 : vector<8x1xf32>
    %cst_18 = arith.constant 9.99999974E-6 : f32
    %23 = vector.broadcast %cst_18 : f32 to vector<8x1xf32>
    %24 = arith.addf %22, %23 : vector<8x1xf32>
    %25 = math.rsqrt %24 : vector<8x1xf32>
    %26 = vector.broadcast %25 : vector<8x1xf32> to vector<8x256xf32>
    %27 = vector.broadcast %10 : vector<1x256xf32> to vector<8x256xf32>
    %28 = arith.mulf %26, %27 : vector<8x256xf32>
    %29 = vector.broadcast %18 : vector<8x1xf32> to vector<8x256xf32>
    %30 = arith.mulf %29, %28 : vector<8x256xf32>
    %31 = vector.broadcast %11 : vector<1x256xf32> to vector<8x256xf32>
    %32 = arith.subf %31, %30 : vector<8x256xf32>
    %33 = arith.mulf %9, %28 : vector<8x256xf32>
    %34 = arith.addf %33, %32 : vector<8x256xf32>
    %cst_19 = arith.constant 0.000000e+00 : f32
    %35 = vector.broadcast %cst_19 : f32 to vector<8x256xf32>
    %36 = arith.maximumf %34, %35 : vector<8x256xf32>
    %37 = arith.truncf %36 : vector<8x256xf32> to vector<8x256xbf16>
    %c0_20 = arith.constant 0 : index
    %c0_21 = arith.constant 0 : index
    %38 = vector.load %arg8[%c0_20, %c0_21] : memref<256x128xbf16, #tpu.memory_space<vmem>>, vector<256x128xbf16>
    %cst_22 = arith.constant dense<0.000000e+00> : vector<8x128xf32>
    %39 = tpu.matmul %37, %38, %cst_22 {dimension_numbers = #tpu.dot_dimension_numbers<[1], [0], [0], [1], [0, 0, 1, 1], [], []>} : vector<8x256xbf16>, vector<256x128xbf16>, vector<8x128xf32> -> vector<8x128xf32>
    %c0_23 = arith.constant 0 : index
    %c0_24 = arith.constant 0 : index
    %40 = vector.load %arg9[%c0_23, %c0_24] : memref<1x128xf32, #tpu.memory_space<vmem>>, vector<1x128xf32>
    %41 = vector.broadcast %40 : vector<1x128xf32> to vector<8x128xf32>
    %42 = arith.addf %39, %41 : vector<8x128xf32>
    %c0_25 = arith.constant 0 : index
    %c0_26 = arith.constant 0 : index
    %43 = vector.load %arg10[%c0_25, %c0_26] : memref<1x128xf32, #tpu.memory_space<vmem>>, vector<1x128xf32>
    %c0_27 = arith.constant 0 : index
    %c0_28 = arith.constant 0 : index
    %44 = vector.load %arg11[%c0_27, %c0_28] : memref<1x128xf32, #tpu.memory_space<vmem>>, vector<1x128xf32>
    %cst_29 = arith.constant dense<0.000000e+00> : vector<8xf32>
    %45 = vector.multi_reduction <add>, %42, %cst_29 [1] : vector<8x128xf32> to vector<8xf32>
    %46 = vector.shape_cast %45 : vector<8xf32> to vector<8x1xf32>
    %47 = arith.mulf %42, %42 : vector<8x128xf32>
    %cst_30 = arith.constant dense<0.000000e+00> : vector<8xf32>
    %48 = vector.multi_reduction <add>, %47, %cst_30 [1] : vector<8x128xf32> to vector<8xf32>
    %49 = vector.shape_cast %48 : vector<8xf32> to vector<8x1xf32>
    %cst_31 = arith.constant 7.812500e-03 : f32
    %50 = vector.broadcast %cst_31 : f32 to vector<8x1xf32>
    %51 = arith.mulf %46, %50 : vector<8x1xf32>
    %cst_32 = arith.constant 7.812500e-03 : f32
    %52 = vector.broadcast %cst_32 : f32 to vector<8x1xf32>
    %53 = arith.mulf %49, %52 : vector<8x1xf32>
    %54 = arith.mulf %51, %51 : vector<8x1xf32>
    %55 = arith.subf %53, %54 : vector<8x1xf32>
    %cst_33 = arith.constant 9.99999974E-6 : f32
    %56 = vector.broadcast %cst_33 : f32 to vector<8x1xf32>
    %57 = arith.addf %55, %56 : vector<8x1xf32>
    %58 = math.rsqrt %57 : vector<8x1xf32>
    %59 = vector.broadcast %58 : vector<8x1xf32> to vector<8x128xf32>
    %60 = vector.broadcast %43 : vector<1x128xf32> to vector<8x128xf32>
    %61 = arith.mulf %59, %60 : vector<8x128xf32>
    %62 = vector.broadcast %51 : vector<8x1xf32> to vector<8x128xf32>
    %63 = arith.mulf %62, %61 : vector<8x128xf32>
    %64 = vector.broadcast %44 : vector<1x128xf32> to vector<8x128xf32>
    %65 = arith.subf %64, %63 : vector<8x128xf32>
    %66 = arith.mulf %42, %61 : vector<8x128xf32>
    %67 = arith.addf %66, %65 : vector<8x128xf32>
    %cst_34 = arith.constant 0.000000e+00 : f32
    %68 = vector.broadcast %cst_34 : f32 to vector<8x128xf32>
    %69 = arith.maximumf %67, %68 : vector<8x128xf32>
    %c0_35 = arith.constant 0 : index
    %c0_36 = arith.constant 0 : index
    %70 = vector.load %arg12[%c0_35, %c0_36] : memref<1x128xf32, #tpu.memory_space<vmem>>, vector<1x128xf32>
    %71 = vector.broadcast %70 : vector<1x128xf32> to vector<8x128xf32>
    %72 = arith.mulf %69, %71 : vector<8x128xf32>
    %cst_37 = arith.constant dense<0.000000e+00> : vector<8xf32>
    %73 = vector.multi_reduction <add>, %72, %cst_37 [1] : vector<8x128xf32> to vector<8xf32>
    %74 = vector.shape_cast %73 : vector<8xf32> to vector<8x1xf32>
    %c0_38 = arith.constant 0 : index
    %c0_39 = arith.constant 0 : index
    %75 = vector.load %arg13[%c0_38, %c0_39] : memref<1x1xf32, #tpu.memory_space<vmem>>, vector<1x1xf32>
    %76 = vector.broadcast %75 : vector<1x1xf32> to vector<8x1xf32>
    %77 = arith.addf %74, %76 : vector<8x1xf32>
    %c0_40 = arith.constant 0 : index
    %c0_41 = arith.constant 0 : index
    %78 = vector.load %arg14[%c0_40, %c0_41] : memref<8x1xf32, #tpu.memory_space<vmem>>, vector<8x1xf32>
    tpu.vector_store %arg14[%c0_40, %c0_41], %77 {strides = array<i32>} : memref<8x1xf32, #tpu.memory_space<vmem>>, vector<8x1xf32>,
    return
  }
  func.func @transform_0(%arg0: i32) -> (i32, i32) {
    %c0_i32 = arith.constant 0 : i32
    %c0_i32_0 = arith.constant 0 : i32
    return %arg0, %c0_i32 : i32, i32
  }
  func.func @transform_1(%arg0: i32) -> (i32, i32) {
    %c0_i32 = arith.constant 0 : i32
    %c0_i32_0 = arith.constant 0 : i32
    return %arg0, %c0_i32 : i32, i32
  }
  func.func @transform_2(%arg0: i32) -> (i32, i32) {
    %c0_i32 = arith.constant 0 : i32
    %c0_i32_0 = arith.constant 0 : i32
    %c0_i32_1 = arith.constant 0 : i32
    return %c0_i32, %c0_i32_0 : i32, i32
  }
  func.func @transform_3(%arg0: i32) -> (i32, i32) {
    %c0_i32 = arith.constant 0 : i32
    %c0_i32_0 = arith.constant 0 : i32
    %c0_i32_1 = arith.constant 0 : i32
    return %c0_i32, %c0_i32_0 : i32, i32
  }
  func.func @transform_4(%arg0: i32) -> (i32, i32) {
    %c0_i32 = arith.constant 0 : i32
    %c0_i32_0 = arith.constant 0 : i32
    %c0_i32_1 = arith.constant 0 : i32
    return %c0_i32, %c0_i32_0 : i32, i32
  }
  func.func @transform_5(%arg0: i32) -> (i32, i32) {
    %c0_i32 = arith.constant 0 : i32
    %c0_i32_0 = arith.constant 0 : i32
    %c0_i32_1 = arith.constant 0 : i32
    return %c0_i32, %c0_i32_0 : i32, i32
  }
  func.func @transform_6(%arg0: i32) -> (i32, i32) {
    %c0_i32 = arith.constant 0 : i32
    %c0_i32_0 = arith.constant 0 : i32
    %c0_i32_1 = arith.constant 0 : i32
    return %c0_i32, %c0_i32_0 : i32, i32
  }
  func.func @transform_7(%arg0: i32) -> (i32, i32) {
    %c0_i32 = arith.constant 0 : i32
    %c0_i32_0 = arith.constant 0 : i32
    %c0_i32_1 = arith.constant 0 : i32
    return %c0_i32, %c0_i32_0 : i32, i32
  }
  func.func @transform_8(%arg0: i32) -> (i32, i32) {
    %c0_i32 = arith.constant 0 : i32
    %c0_i32_0 = arith.constant 0 : i32
    %c0_i32_1 = arith.constant 0 : i32
    return %c0_i32, %c0_i32_0 : i32, i32
  }
  func.func @transform_9(%arg0: i32) -> (i32, i32) {
    %c0_i32 = arith.constant 0 : i32
    %c0_i32_0 = arith.constant 0 : i32
    %c0_i32_1 = arith.constant 0 : i32
    return %c0_i32, %c0_i32_0 : i32, i32
  }
  func.func @transform_10(%arg0: i32) -> (i32, i32) {
    %c0_i32 = arith.constant 0 : i32
    %c0_i32_0 = arith.constant 0 : i32
    %c0_i32_1 = arith.constant 0 : i32
    return %c0_i32, %c0_i32_0 : i32, i32
  }
  func.func @transform_11(%arg0: i32) -> (i32, i32) {
    %c0_i32 = arith.constant 0 : i32
    %c0_i32_0 = arith.constant 0 : i32
    %c0_i32_1 = arith.constant 0 : i32
    return %c0_i32, %c0_i32_0 : i32, i32
  }
  func.func @transform_12(%arg0: i32) -> (i32, i32) {
    %c0_i32 = arith.constant 0 : i32
    %c0_i32_0 = arith.constant 0 : i32
    %c0_i32_1 = arith.constant 0 : i32
    return %c0_i32, %c0_i32_0 : i32, i32
  }
  func.func @transform_13(%arg0: i32) -> (i32, i32) {
    %c0_i32 = arith.constant 0 : i32
    %c0_i32_0 = arith.constant 0 : i32
    return %arg0, %c0_i32 : i32, i32
  }
}

</mosaic_0001>

<llo_original>
// kernel: tpu_custom_call.1
$region0: #{tpu_custom_call.1}
  #allocation0 [shape = 'u32[]', space=smem, size = 0x4, offset = 0x4, fixed_abs, tag = 'smem constant byte address 0x4 - core index']
  #allocation1 [shape = 'u32[144,128]{1,0:T(1,128)}', space=vmem, size = 0x12000, scoped, tag = 'internal scratch']
  #allocation2 [shape = 'f32[1,1]{1,0:T(1,128)S(1)}', space=vmem, size = 0x200, scoped, tag = 'scoped memory for tpu_custom_call.1']
  %s0 = inlined_call_operand.hbm [shape: bf16[8,16], index: 0, kind: input, shape index: {}]
  %s1 = inlined_call_operand.vmem [shape: bf16[8,8], index: 1, kind: input, shape index: {}]
  %s2 = inlined_call_operand.hbm [shape: bf16[16,256], index: 2, kind: input, shape index: {}]
  %s3 = inlined_call_operand.vmem [shape: bf16[8,256], index: 3, kind: input, shape index: {}]
  %s4 = inlined_call_operand.vmem [shape: f32[1,256], index: 4, kind: input, shape index: {}]
  %s5 = inlined_call_operand.vmem [shape: f32[1,256], index: 5, kind: input, shape index: {}]
  %s6 = inlined_call_operand.vmem [shape: f32[1,256], index: 6, kind: input, shape index: {}]
  %s7 = inlined_call_operand.hbm [shape: bf16[256,128], index: 7, kind: input, shape index: {}]
  %s8 = inlined_call_operand.vmem [shape: f32[1,128], index: 8, kind: input, shape index: {}]
  %s9 = inlined_call_operand.vmem [shape: f32[1,128], index: 9, kind: input, shape index: {}]
  %s10 = inlined_call_operand.vmem [shape: f32[1,128], index: 10, kind: input, shape index: {}]
  %s11 = inlined_call_operand.vmem [shape: f32[1,128], index: 11, kind: input, shape index: {}]
  %s12 = inlined_call_operand.<no memory space> [shape: f32[1,1], index: 12, kind: input, shape index: {}]
  %s13 = inlined_call_operand.vmem [shape: f32[8,1], index: 13, kind: output, shape index: {}]
  %s14 = sld [smem:[#allocation0]]
  $region74: #{tpu_custom_call.1} parent=0
    _
  %s16 = ssub.s32 1, %s14
  %s17 = scalar_select 0, %s16, %s14
  %v18 = vstv %s12
  %19 = vst [vmem:[#allocation2] sm:$0x1] %v18
  $region1: #{tpu_custom_call.1} parent=0
    #allocation3 [shape = 'u8[2048]{0}', space=vmem, size = 0x800, scoped, tag = 'input window, operand 0, single buffered']
    #allocation4 [shape = 's32[1]{0}', space=sflag, size = 0x4, scoped, tag = 'scoped memory for tpu_custom_call.1']
    #allocation5 [shape = 'u8[8192]{0}', space=vmem, size = 0x2000, scoped, tag = 'input window, operand 2, single buffered']
    #allocation6 [shape = 's32[1]{0}', space=sflag, size = 0x4, scoped, tag = 'scoped memory for tpu_custom_call.1']
    #allocation7 [shape = 'u8[65536]{0}', space=vmem, size = 0x10000, scoped, tag = 'input window, operand 7, single buffered']
    %20 = vsyncpa [#allocation4], 0
    %21 = vsyncpa [#allocation6], 0
    // Predicated region
    $region2: #{tpu_custom_call.1} parent=1 // pred_check
      _
    $region3: #{tpu_custom_call.1} parent=1 // pred_check_branch
      %23 = sbr.rel (0) target = $region5
    $region4: #{tpu_custom_call.1} parent=1 // pred_region
      %s25 = ssub.s32 64, 64
      %26 = vsyncadd [#allocation4], %s25
      %s28 = sshll.u32 [#allocation3], 4
      %s29 = int_to_ptr.vmem [resolvable:$true] %s28
      %31 = dma.hbm_to_vmem [thread:$0]  %s0, 64, %s29, [#allocation4]
    $region5: #{tpu_custom_call.1} parent=1 // pred_fallthru
      _
    // Predicated region
    $region6: #{tpu_custom_call.1} parent=1 // pred_check
      _
    $region7: #{tpu_custom_call.1} parent=1 // pred_check_branch
      %33 = sbr.rel (0) target = $region9
    $region8: #{tpu_custom_call.1} parent=1 // pred_region
      _
    $region9: #{tpu_custom_call.1} parent=1 // pred_fallthru
      _
    // Predicated region
    $region10: #{tpu_custom_call.1} parent=1 // pred_check
      _
    $region11: #{tpu_custom_call.1} parent=1 // pred_check_branch
      %35 = sbr.rel (0) target = $region13
    $region12: #{tpu_custom_call.1} parent=1 // pred_region
      %s37 = ssub.s32 256, 256
      %38 = vsyncadd [#allocation6], %s37
      %s39 = sshll.u32 [#allocation5], 4
      %s40 = int_to_ptr.vmem [resolvable:$true] %s39
      %45 = dma.hbm_to_vmem [thread:$0]  %s2, 256, %s40, [#allocation6], 128, 128, 8
    $region13: #{tpu_custom_call.1} parent=1 // pred_fallthru
      _
    // Predicated region
    $region14: #{tpu_custom_call.1} parent=1 // pred_check
      _
    $region15: #{tpu_custom_call.1} parent=1 // pred_check_branch
      %47 = sbr.rel (0) target = $region17
    $region16: #{tpu_custom_call.1} parent=1 // pred_region
      _
    $region17: #{tpu_custom_call.1} parent=1 // pred_fallthru
      _
    // Predicated region
    $region18: #{tpu_custom_call.1} parent=1 // pred_check
      _
    $region19: #{tpu_custom_call.1} parent=1 // pred_check_branch
      %49 = sbr.rel (0) target = $region21
    $region20: #{tpu_custom_call.1} parent=1 // pred_region
      _
    $region21: #{tpu_custom_call.1} parent=1 // pred_fallthru
      _
    // Predicated region
    $region22: #{tpu_custom_call.1} parent=1 // pred_check
      _
    $region23: #{tpu_custom_call.1} parent=1 // pred_check_branch
      %51 = sbr.rel (0) target = $region25
    $region24: #{tpu_custom_call.1} parent=1 // pred_region
      _
    $region25: #{tpu_custom_call.1} parent=1 // pred_fallthru
      _
    // Predicated region
    $region26: #{tpu_custom_call.1} parent=1 // pred_check
      _
    $region27: #{tpu_custom_call.1} parent=1 // pred_check_branch
      %53 = sbr.rel (0) target = $region29
    $region28: #{tpu_custom_call.1} parent=1 // pred_region
      _
    $region29: #{tpu_custom_call.1} parent=1 // pred_fallthru
      _
    // Predicated region
    $region30: #{tpu_custom_call.1} parent=1 // pred_check
      _
    $region31: #{tpu_custom_call.1} parent=1 // pred_check_branch
      %55 = sbr.rel (0) target = $region33
    $region32: #{tpu_custom_call.1} parent=1 // pred_region
      %s57 = ssub.s32 2048, 2048
      %58 = vsyncadd [#allocation6], %s57
      %s59 = sshll.u32 [#allocation7], 4
      %s60 = int_to_ptr.vmem [resolvable:$true] %s59
      %65 = dma.hbm_to_vmem [thread:$0]  %s7, 2048, %s60, [#allocation6], 64, 64, 4
    $region33: #{tpu_custom_call.1} parent=1 // pred_fallthru
      _
    // Predicated region
    $region34: #{tpu_custom_call.1} parent=1 // pred_check
      _
    $region35: #{tpu_custom_call.1} parent=1 // pred_check_branch
      %67 = sbr.rel (0) target = $region37
    $region36: #{tpu_custom_call.1} parent=1 // pred_region
      _
    $region37: #{tpu_custom_call.1} parent=1 // pred_fallthru
      _
    // Predicated region
    $region38: #{tpu_custom_call.1} parent=1 // pred_check
      _
    $region39: #{tpu_custom_call.1} parent=1 // pred_check_branch
      %69 = sbr.rel (0) target = $region41
    $region40: #{tpu_custom_call.1} parent=1 // pred_region
      _
    $region41: #{tpu_custom_call.1} parent=1 // pred_fallthru
      _
    // Predicated region
    $region42: #{tpu_custom_call.1} parent=1 // pred_check
      _
    $region43: #{tpu_custom_call.1} parent=1 // pred_check_branch
      %71 = sbr.rel (0) target = $region45
    $region44: #{tpu_custom_call.1} parent=1 // pred_region
      _
    $region45: #{tpu_custom_call.1} parent=1 // pred_fallthru
      _
    // Predicated region
    $region46: #{tpu_custom_call.1} parent=1 // pred_check
      _
    $region47: #{tpu_custom_call.1} parent=1 // pred_check_branch
      %73 = sbr.rel (0) target = $region49
    $region48: #{tpu_custom_call.1} parent=1 // pred_region
      _
    $region49: #{tpu_custom_call.1} parent=1 // pred_fallthru
      _
    // Predicated region
    $region50: #{tpu_custom_call.1} parent=1 // pred_check
      _
    $region51: #{tpu_custom_call.1} parent=1 // pred_check_branch
      %75 = sbr.rel (0) target = $region53
    $region52: #{tpu_custom_call.1} parent=1 // pred_region
      _
    $region53: #{tpu_custom_call.1} parent=1 // pred_fallthru
      _
    // Predicated region
    $region54: #{tpu_custom_call.1} parent=1 // pred_check
      _
    $region55: #{tpu_custom_call.1} parent=1 // pred_check_branch
      %77 = sbr.rel (0) target = $region57
    $region56: #{tpu_custom_call.1} parent=1 // pred_region
      %78 = dma.done [#allocation4], 64
    $region57: #{tpu_custom_call.1} parent=1 // pred_fallthru
      _
    // Predicated region
    $region58: #{tpu_custom_call.1} parent=1 // pred_check
      _
    $region59: #{tpu_custom_call.1} parent=1 // pred_check_branch
      %80 = sbr.rel (0) target = $region61
    $region60: #{tpu_custom_call.1} parent=1 // pred_region
      %81 = dma.done [#allocation6], 256
    $region61: #{tpu_custom_call.1} parent=1 // pred_fallthru
      _
    // Predicated region
    $region62: #{tpu_custom_call.1} parent=1 // pred_check
      _
    $region63: #{tpu_custom_call.1} parent=1 // pred_check_branch
      %83 = sbr.rel (0) target = $region65
    $region64: #{tpu_custom_call.1} parent=1 // pred_region
      %84 = dma.done [#allocation6], 2048
    $region65: #{tpu_custom_call.1} parent=1 // pred_fallthru
      _
    %v86 = vld [vmem:[#allocation3] sm:$0xf]
    %v87 = vld [vmem:[#allocation5] sm:$0xff]
    %v88 = vld [vmem:[#allocation5 + $0x8] sm:$0xff]
    %v89 = vld [vmem:[%s1] sm:$0xf]
    %v90 = vld [vmem:[%s3] sm:$0xff]
    %v92 = vunpack.c.l.b16 %v90
    %v93 = vunpack.c.h.b16 %v90
    %v94 = vpack.c.b16 %v92, %v92
    %v95 = vpack.c.b16 %v93, %v93
    %vm96 = vcmask 64512
    %v98 = vsel %vm96, %v89, 0
    %vm100 = vcmask 1043456
    %v102 = vsel %vm100, %v94, 0
    %v105 = vsel %vm100, %v95, 0
    %107 = vmatprep.subr.bf16.mxu0 %v105
    %108 = vmatpush1.bf16.msra.mxu0 %v102
    %109 = vmatprep.subr.bf16.mxu0 0
    %110 = vmatpush1.bf16.msra.mxu0 0
    %111 = vmatprep.subr.bf16.mxu0 0
    %112 = vmatpush1.bf16.msra.mxu0 0
    %113 = vmatprep.subr.bf16.mxu0 0
    %114 = vmatpush1.bf16.msra.mxu0 0
    %115 = vmatprep.subr.bf16.mxu0 0
    %116 = vmatpush1.bf16.msra.mxu0 0
    %117 = vmatprep.subr.bf16.mxu0 0
    %118 = vmatpush1.bf16.msra.mxu0 0
    %119 = vmatprep.subr.bf16.mxu0 0
    %120 = vmatpush1.bf16.msra.mxu0 0
    %121 = vmatprep.subr.bf16.mxu0 0
    %122 = vmatpush1.bf16.msra.mxu0 0
    %123 = vmatprep.subr.bf16.mxu0 0
    %124 = vmatpush1.bf16.msra.mxu0 0
    %125 = vmatprep.subr.bf16.mxu0 0
    %126 = vmatpush1.bf16.msra.mxu0 0
    %127 = vmatprep.subr.bf16.mxu0 0
    %128 = vmatpush1.bf16.msra.mxu0 0
    %129 = vmatprep.subr.bf16.mxu0 0
    %130 = vmatpush1.bf16.msra.mxu0 0
    %131 = vmatprep.subr.bf16.mxu0 0
    %132 = vmatpush1.bf16.msra.mxu0 0
    %133 = vmatprep.subr.bf16.mxu0 0
    %134 = vmatpush1.bf16.msra.mxu0 0
    %135 = vmatprep.subr.bf16.mxu0 0
    %136 = vmatpush1.bf16.msra.mxu0 0
    %137 = vmatprep.subr.bf16.mxu0 0
    %138 = vmatpush1.bf16.msra.mxu0 0
    %139 = vmatprep.mubr.bf16.mxu0 0
    %140 = vmatmul.mubr.bf16.gmra.mrb[0].mxu0 %v98
    %v141 = vpop.f32.mrb[0].mxu0
    %v142 = vadd.f32 0.0, %v141
    %v143 = vpop.f32.mrb[0].mxu0
    %v144 = vadd.f32 0.0, %v143
    %v145 = vpop.f32.mrb[0].mxu0
    %v146 = vpop.f32.mrb[0].mxu0
    %147 = vdwg.mxu0
    %v150 = vunpack.c.l.b16 %v87
    %v151 = vunpack.c.h.b16 %v87
    %v152 = vunpack.c.l.b16 %v88
    %v153 = vunpack.c.h.b16 %v88
    %v154 = vpack.c.b16 %v152, %v150
    %v155 = vpack.c.b16 %v153, %v151
    %vm158 = vcmask 130048
    %v160 = vsel %vm158, %v86, 0
    %162 = vmatprep.subr.bf16.mxu0 %v155
    %163 = vmatpush1.bf16.msra.mxu0 %v154
    %164 = vmatprep.subr.bf16.mxu0 0
    %165 = vmatpush1.bf16.msra.mxu0 0
    %166 = vmatprep.subr.bf16.mxu0 0
    %167 = vmatpush1.bf16.msra.mxu0 0
    %168 = vmatprep.subr.bf16.mxu0 0
    %169 = vmatpush1.bf16.msra.mxu0 0
    %170 = vmatprep.subr.bf16.mxu0 0
    %171 = vmatpush1.bf16.msra.mxu0 0
    %172 = vmatprep.subr.bf16.mxu0 0
    %173 = vmatpush1.bf16.msra.mxu0 0
    %174 = vmatprep.subr.bf16.mxu0 0
    %175 = vmatpush1.bf16.msra.mxu0 0
    %176 = vmatprep.subr.bf16.mxu0 0
    %177 = vmatpush1.bf16.msra.mxu0 0
    %178 = vmatprep.subr.bf16.mxu0 0
    %179 = vmatpush1.bf16.msra.mxu0 0
    %180 = vmatprep.subr.bf16.mxu0 0
    %181 = vmatpush1.bf16.msra.mxu0 0
    %182 = vmatprep.subr.bf16.mxu0 0
    %183 = vmatpush1.bf16.msra.mxu0 0
    %184 = vmatprep.subr.bf16.mxu0 0
    %185 = vmatpush1.bf16.msra.mxu0 0
    %186 = vmatprep.subr.bf16.mxu0 0
    %187 = vmatpush1.bf16.msra.mxu0 0
    %188 = vmatprep.subr.bf16.mxu0 0
    %189 = vmatpush1.bf16.msra.mxu0 0
    %190 = vmatprep.subr.bf16.mxu0 0
    %191 = vmatpush1.bf16.msra.mxu0 0
    %192 = vmatprep.subr.bf16.mxu0 0
    %193 = vmatpush1.bf16.msra.mxu0 0
    %194 = vmatprep.mubr.bf16.mxu0 0
    %195 = vmatmul.mubr.bf16.gmra.mrb[0].mxu0 %v160
    %v196 = vpop.f32.mrb[0].mxu0
    %v197 = vadd.f32 %v142, %v196
    %v198 = vpop.f32.mrb[0].mxu0
    %v199 = vadd.f32 %v144, %v198
    %v200 = vpop.f32.mrb[0].mxu0
    %v201 = vpop.f32.mrb[0].mxu0
    %202 = vdwg.mxu0
    %v203 = vld [vmem:[%s4] sm:$0x3]
    %v205 = vlaneseq
    %v206 = vshrl.u32 %v205, 7
    %v207 = vsub.s32 0, %v206
    %v208 = vrot.slane %v203, %v207
    %v209 = vlaneseq
    %v210 = vshrl.u32 %v209, 7
    %v211 = vsub.s32 1, %v210
    %v212 = vrot.slane %v203, %v211
    %v215 = vadd.f32 %v197, %v208
    %v216 = vadd.f32 %v199, %v212
    %v217 = vld [vmem:[%s5] sm:$0x3]
    %v218 = vld [vmem:[%s6] sm:$0x3]
    %v219 = vadd.f32 %v215, %v216
    %220 = vadd.xlane.f32.xlu0 %v219
    %v221 = vpop.xlane.xlu0 %220
    %v222 = vmul.f32 %v215, %v215
    %v223 = vmul.f32 %v216, %v216
    %v224 = vadd.f32 %v222, %v223
    %225 = vadd.xlane.f32.xlu0 %v224
    %v226 = vpop.xlane.xlu0 %225
    %v227 = vmul.f32 %v221, 0.00390625
    %v228 = vmul.f32 %v226, 0.00390625
    %v229 = vmul.f32 %v227, %v227
    %v230 = vsub.f32 %v228, %v229
    %v231 = vadd.f32 %v230, 1e-05
    %v232 = vrsqrt.pop %v231
    %v234 = vlaneseq
    %v235 = vshrl.u32 %v234, 7
    %v236 = vsub.s32 0, %v235
    %v237 = vrot.slane %v217, %v236
    %v238 = vlaneseq
    %v239 = vshrl.u32 %v238, 7
    %v240 = vsub.s32 1, %v239
    %v241 = vrot.slane %v217, %v240
    %v244 = vmul.f32 %v232, %v237
    %v245 = vmul.f32 %v232, %v241
    %v246 = vmul.f32 %v227, %v244
    %v247 = vmul.f32 %v227, %v245
    %v249 = vlaneseq
    %v250 = vshrl.u32 %v249, 7
    %v251 = vsub.s32 0, %v250
    %v252 = vrot.slane %v218, %v251
    %v253 = vlaneseq
    %v254 = vshrl.u32 %v253, 7
    %v255 = vsub.s32 1, %v254
    %v256 = vrot.slane %v218, %v255
    %v259 = vsub.f32 %v252, %v246
    %v260 = vsub.f32 %v256, %v247
    %v261 = vmul.f32 %v215, %v244
    %v262 = vmul.f32 %v216, %v245
    %v263 = vadd.f32 %v261, %v259
    %v264 = vadd.f32 %v262, %v260
    %v265 = vmax.f32 %v263, 0.0
    %v266 = vmax.f32 %v264, 0.0
    %v267 = vpack.c.bf16 %v265, %v265
    %v268 = vpack.c.bf16 %v266, %v266
    %v269 = vld [vmem:[#allocation7] sm:$0xf]
    %v270 = vld [vmem:[#allocation7 + $0x4] sm:$0xf]
    %v271 = vld [vmem:[#allocation7 + $0x8] sm:$0xf]
    %v272 = vld [vmem:[#allocation7 + $0xc] sm:$0xf]
    %v273 = vld [vmem:[#allocation7 + $0x10] sm:$0xf]
    %v274 = vld [vmem:[#allocation7 + $0x14] sm:$0xf]
    %v275 = vld [vmem:[#allocation7 + $0x18] sm:$0xf]
    %v276 = vld [vmem:[#allocation7 + $0x1c] sm:$0xf]
    %v277 = vld [vmem:[#allocation7 + $0x20] sm:$0xf]
    %v278 = vld [vmem:[#allocation7 + $0x24] sm:$0xf]
    %v279 = vld [vmem:[#allocation7 + $0x28] sm:$0xf]
    %v280 = vld [vmem:[#allocation7 + $0x2c] sm:$0xf]
    %v281 = vld [vmem:[#allocation7 + $0x30] sm:$0xf]
    %v282 = vld [vmem:[#allocation7 + $0x34] sm:$0xf]
    %v283 = vld [vmem:[#allocation7 + $0x38] sm:$0xf]
    %v284 = vld [vmem:[#allocation7 + $0x3c] sm:$0xf]
    %v285 = vld [vmem:[#allocation7 + $0x40] sm:$0xf]
    %v286 = vld [vmem:[#allocation7 + $0x44] sm:$0xf]
    %v287 = vld [vmem:[#allocation7 + $0x48] sm:$0xf]
    %v288 = vld [vmem:[#allocation7 + $0x4c] sm:$0xf]
    %v289 = vld [vmem:[#allocation7 + $0x50] sm:$0xf]
    %v290 = vld [vmem:[#allocation7 + $0x54] sm:$0xf]
    %v291 = vld [vmem:[#allocation7 + $0x58] sm:$0xf]
    %v292 = vld [vmem:[#allocation7 + $0x5c] sm:$0xf]
    %v293 = vld [vmem:[#allocation7 + $0x60] sm:$0xf]
    %v294 = vld [vmem:[#allocation7 + $0x64] sm:$0xf]
    %v295 = vld [vmem:[#allocation7 + $0x68] sm:$0xf]
    %v296 = vld [vmem:[#allocation7 + $0x6c] sm:$0xf]
    %v297 = vld [vmem:[#allocation7 + $0x70] sm:$0xf]
    %v298 = vld [vmem:[#allocation7 + $0x74] sm:$0xf]
    %v299 = vld [vmem:[#allocation7 + $0x78] sm:$0xf]
    %v300 = vld [vmem:[#allocation7 + $0x7c] sm:$0xf]
    %v301 = vld [vmem:[%s8] sm:$0x1]
    %v303 = vlaneseq
    %v304 = vshrl.u32 %v303, 7
    %v305 = vsub.s32 0, %v304
    %v306 = vrot.slane %v301, %v305
    %v340 = vunpack.c.l.b16 %v269
    %v341 = vunpack.c.l.b16 %v270
    %v342 = vunpack.c.l.b16 %v271
    %v343 = vunpack.c.l.b16 %v272
    %v344 = vunpack.c.l.b16 %v273
    %v345 = vunpack.c.l.b16 %v274
    %v346 = vunpack.c.l.b16 %v275
    %v347 = vunpack.c.l.b16 %v276
    %v348 = vunpack.c.l.b16 %v277
    %v349 = vunpack.c.l.b16 %v278
    %v350 = vunpack.c.l.b16 %v279
    %v351 = vunpack.c.l.b16 %v280
    %v352 = vunpack.c.l.b16 %v281
    %v353 = vunpack.c.l.b16 %v282
    %v354 = vunpack.c.l.b16 %v283
    %v355 = vunpack.c.l.b16 %v284
    %v356 = vunpack.c.l.b16 %v285
    %v357 = vunpack.c.l.b16 %v286
    %v358 = vunpack.c.l.b16 %v287
    %v359 = vunpack.c.l.b16 %v288
    %v360 = vunpack.c.l.b16 %v289
    %v361 = vunpack.c.l.b16 %v290
    %v362 = vunpack.c.l.b16 %v291
    %v363 = vunpack.c.l.b16 %v292
    %v364 = vunpack.c.l.b16 %v293
    %v365 = vunpack.c.l.b16 %v294
    %v366 = vunpack.c.l.b16 %v295
    %v367 = vunpack.c.l.b16 %v296
    %v368 = vunpack.c.l.b16 %v297
    %v369 = vunpack.c.l.b16 %v298
    %v370 = vunpack.c.l.b16 %v299
    %v371 = vunpack.c.l.b16 %v300
    %v372 = vpack.c.b16 %v341, %v340
    %v373 = vpack.c.b16 %v343, %v342
    %v374 = vpack.c.b16 %v345, %v344
    %v375 = vpack.c.b16 %v347, %v346
    %v376 = vpack.c.b16 %v349, %v348
    %v377 = vpack.c.b16 %v351, %v350
    %v378 = vpack.c.b16 %v353, %v352
    %v379 = vpack.c.b16 %v355, %v354
    %v380 = vpack.c.b16 %v357, %v356
    %v381 = vpack.c.b16 %v359, %v358
    %v382 = vpack.c.b16 %v361, %v360
    %v383 = vpack.c.b16 %v363, %v362
    %v384 = vpack.c.b16 %v365, %v364
    %v385 = vpack.c.b16 %v367, %v366
    %v386 = vpack.c.b16 %v369, %v368
    %v387 = vpack.c.b16 %v371, %v370
    %404 = vmatprep.subr.bf16.mxu0 0
    %405 = vmatpush1.bf16.msra.mxu0 %v372
    %406 = vmatprep.subr.bf16.mxu0 0
    %407 = vmatpush1.bf16.msra.mxu0 %v373
    %408 = vmatprep.subr.bf16.mxu0 0
    %409 = vmatpush1.bf16.msra.mxu0 %v374
    %410 = vmatprep.subr.bf16.mxu0 0
    %411 = vmatpush1.bf16.msra.mxu0 %v375
    %412 = vmatprep.subr.bf16.mxu0 0
    %413 = vmatpush1.bf16.msra.mxu0 %v376
    %414 = vmatprep.subr.bf16.mxu0 0
    %415 = vmatpush1.bf16.msra.mxu0 %v377
    %416 = vmatprep.subr.bf16.mxu0 0
    %417 = vmatpush1.bf16.msra.mxu0 %v378
    %418 = vmatprep.subr.bf16.mxu0 0
    %419 = vmatpush1.bf16.msra.mxu0 %v379
    %420 = vmatprep.subr.bf16.mxu0 0
    %421 = vmatpush1.bf16.msra.mxu0 %v380
    %422 = vmatprep.subr.bf16.mxu0 0
    %423 = vmatpush1.bf16.msra.mxu0 %v381
    %424 = vmatprep.subr.bf16.mxu0 0
    %425 = vmatpush1.bf16.msra.mxu0 %v382
    %426 = vmatprep.subr.bf16.mxu0 0
    %427 = vmatpush1.bf16.msra.mxu0 %v383
    %428 = vmatprep.subr.bf16.mxu0 0
    %429 = vmatpush1.bf16.msra.mxu0 %v384
    %430 = vmatprep.subr.bf16.mxu0 0
    %431 = vmatpush1.bf16.msra.mxu0 %v385
    %432 = vmatprep.subr.bf16.mxu0 0
    %433 = vmatpush1.bf16.msra.mxu0 %v386
    %434 = vmatprep.subr.bf16.mxu0 0
    %435 = vmatpush1.bf16.msra.mxu0 %v387
    %436 = vmatprep.mubr.bf16.mxu0 %v268
    %437 = vmatmul.mubr.bf16.gmra.mrb[0].mxu0 %v267
    %v438 = vpop.f32.mrb[0].mxu0
    %v439 = vadd.f32 %v306, %v438
    %v440 = vpop.f32.mrb[0].mxu0
    %v441 = vpop.f32.mrb[0].mxu0
    %v442 = vpop.f32.mrb[0].mxu0
    %443 = vdwg.mxu0
    %v444 = vld [vmem:[%s9] sm:$0x1]
    %v445 = vld [vmem:[%s10] sm:$0x1]
    %446 = vadd.xlane.f32.xlu0 %v439
    %v447 = vpop.xlane.xlu0 %446
    %v448 = vmul.f32 %v439, %v439
    %449 = vadd.xlane.f32.xlu0 %v448
    %v450 = vpop.xlane.xlu0 %449
    %v451 = vmul.f32 %v447, 0.0078125
    %v452 = vmul.f32 %v450, 0.0078125
    %v453 = vmul.f32 %v451, %v451
    %v454 = vsub.f32 %v452, %v453
    %v455 = vadd.f32 %v454, 1e-05
    %v456 = vrsqrt.pop %v455
    %v458 = vlaneseq
    %v459 = vshrl.u32 %v458, 7
    %v460 = vsub.s32 0, %v459
    %v461 = vrot.slane %v444, %v460
    %v463 = vmul.f32 %v456, %v461
    %v464 = vmul.f32 %v451, %v463
    %v466 = vlaneseq
    %v467 = vshrl.u32 %v466, 7
    %v468 = vsub.s32 0, %v467
    %v469 = vrot.slane %v445, %v468
    %v471 = vsub.f32 %v469, %v464
    %v472 = vmul.f32 %v439, %v463
    %v473 = vadd.f32 %v472, %v471
    %v474 = vmax.f32 %v473, 0.0
    %v475 = vld [vmem:[%s11] sm:$0x1]
    %v477 = vlaneseq
    %v478 = vshrl.u32 %v477, 7
    %v479 = vsub.s32 0, %v478
    %v480 = vrot.slane %v475, %v479
    %v482 = vmul.f32 %v474, %v480
    %483 = vadd.xlane.f32.xlu0 %v482
    %v484 = vpop.xlane.xlu0 %483
    %v485 = vld [vmem:[#allocation2] sm:$0x1]
    %v487 = vlaneseq
    %v488 = vshrl.u32 %v487, 7
    %v489 = vsub.s32 0, %v488
    %v490 = vrot.slane %v485, %v489
    %v492 = vadd.f32 %v484, %v490
    %vm493 = vcmask 7168
    %494 = vst.msk [vmem:[%s13] sm:$0xff] %vm493, %v492
    // Predicated region
    $region66: #{tpu_custom_call.1} parent=1 // pred_check
      _
    $region67: #{tpu_custom_call.1} parent=1 // pred_check_branch
      %496 = sbr.rel (0) target = $region69
    $region68: #{tpu_custom_call.1} parent=1 // pred_region
      _
    $region69: #{tpu_custom_call.1} parent=1 // pred_fallthru
      _
    // Predicated region
    $region70: #{tpu_custom_call.1} parent=1 // pred_check
      _
    $region71: #{tpu_custom_call.1} parent=1 // pred_check_branch
      %498 = sbr.rel (0) target = $region73
    $region72: #{tpu_custom_call.1} parent=1 // pred_region
      _
    $region73: #{tpu_custom_call.1} parent=1 // pred_fallthru
      _
    %499 = vsyncpa [#allocation4], 1
    %500 = vsyncpa [#allocation6], 1

</llo_original>
